<compile_context>
chip_gen: v5e
topology: v5e:2x2
jax: 0.10.0
libtpu: 0.0.40
codegen_flags: <defaults>
</compile_context>

<pallas_src>
import functools

import jax
import jax.numpy as jnp
from jax.experimental import pallas as pl
from jax.experimental.pallas import tpu as pltpu


def _hsig_mul_kernel(s_ref, x_ref, o_ref, *, group, hw):
    # s_ref: (R, G)       per-channel gate pre-activation (G channels per row)
    # x_ref: (R, G * hw)  feature map, same contiguous bytes as NCHW
    s = s_ref[...].astype(jnp.float32)
    hs = jnp.clip(s * (1.0 / 6.0) + 0.5, 0.0, 1.0)          # Hardsigmoid, f32 (v5e-safe)

    rows, width = x_ref.shape
    if group == 1:
        hs_e = hs                                            # (R, 1) broadcasts over hw
    else:
        # Expand (R, G) -> (R, G*hw): lane l belongs to channel l // hw. Use range
        # compares + selects (pure VPU; no unaligned (R, G, hw) -> (R, G*hw) reshape).
        lane = jax.lax.broadcasted_iota(jnp.int32, (rows, width), 1)
        hs_e = jnp.zeros((rows, width), jnp.float32)
        for c in range(group):
            m = (lane >= c * hw) & (lane < (c + 1) * hw)
            hs_e = jnp.where(m, hs[:, c:c + 1], hs_e)

    gate = hs_e.astype(o_ref.dtype)                          # bf16 data path on bf16 models
    o_ref[...] = (gate * x_ref[...]).astype(o_ref.dtype)


def hardsigmoid_mul(x128, x124):
    """x128: (N, C, 1, 1), x124: (N, C, H, W) -> (N, C, H, W)."""
    N, C, H, W = x124.shape
    assert x128.shape == (N, C, 1, 1)
    nc = N * C
    hw = H * W

    # Group G channels per row so the last dim is G*hw (lane-dense). Both views are free
    # reshapes of the contiguous NCHW buffers.
    group = next(g for g in (8, 4, 2, 1) if nc % g == 0)
    rows = nc // group

    x2d = x124.reshape(rows, group * hw)
    s2d = x128.reshape(rows, group)

    itemsize = jnp.dtype(x124.dtype).itemsize
    out2d = pl.pallas_call(
        functools.partial(_hsig_mul_kernel, group=group, hw=hw),
        out_shape=jax.ShapeDtypeStruct((rows, group * hw), x124.dtype),
        in_specs=[
            pl.BlockSpec(memory_space=pltpu.MemorySpace.VMEM),   # (rows, G) gate
            pl.BlockSpec(memory_space=pltpu.MemorySpace.VMEM),   # (rows, G*hw) features
        ],
        out_specs=pl.BlockSpec(memory_space=pltpu.MemorySpace.VMEM),
        input_output_aliases={1: 0},     # donate the feature-map buffer to the output
        cost_estimate=pl.CostEstimate(
            flops=2 * nc * hw,
            transcendentals=0,
            bytes_accessed=(2 * nc * hw + nc) * itemsize,
        ),
    )(s2d, x2d)

    return out2d.reshape(N, C, H, W)


if __name__ == "__main__":
    key = jax.random.PRNGKey(0)
    k1, k2 = jax.random.split(key)

    # Shapes implied by the module's forward (already small).
    x124 = jax.random.normal(k1, (1, 576, 7, 7), dtype=jnp.float32)
    x128 = jax.random.normal(k2, (1, 576, 1, 1), dtype=jnp.float32)

    # Pure-JAX reference, computed before the kernel call (kernel donates its own
    # reshaped input view; x124 itself is never touched).
    ref = jnp.clip(x128 / 6.0 + 0.5, 0.0, 1.0) * x124
    ref = jax.block_until_ready(ref)

    out = hardsigmoid_mul(x128, x124)
    out = jax.block_until_ready(out)

    assert out.shape == (1, 576, 7, 7)
    assert jnp.allclose(out, ref, atol=1e-6, rtol=1e-6)

    print("KERNEL_OK")
</pallas_src>

<mosaic_0001>
module attributes {stable_mosaic.version = 11 : i64} {
  func.func @_hsig_mul_kernel(%arg0: memref<72x8xf32, #tpu.memory_space<vmem>>, %arg1: memref<72x392xf32, #tpu.memory_space<vmem>>, %arg2: memref<72x392xf32, #tpu.memory_space<vmem>>) attributes {dimension_semantics = [], scalar_prefetch = 0 : i64, scratch_operands = 0 : i64, tpu.core_type = #tpu.core_type<tc>} {
    %c0 = arith.constant 0 : index
    %c0_0 = arith.constant 0 : index
    %0 = vector.load %arg0[%c0, %c0_0] : memref<72x8xf32, #tpu.memory_space<vmem>>, vector<72x8xf32>
    %cst = arith.constant 0.166666672 : f32
    %1 = vector.broadcast %cst : f32 to vector<72x8xf32>
    %2 = arith.mulf %0, %1 : vector<72x8xf32>
    %cst_1 = arith.constant 5.000000e-01 : f32
    %3 = vector.broadcast %cst_1 : f32 to vector<72x8xf32>
    %4 = arith.addf %2, %3 : vector<72x8xf32>
    %cst_2 = arith.constant 0.000000e+00 : f32
    %cst_3 = arith.constant 1.000000e+00 : f32
    %5 = vector.broadcast %cst_2 : f32 to vector<72x8xf32>
    %6 = arith.maximumf %5, %4 : vector<72x8xf32>
    %7 = vector.broadcast %cst_3 : f32 to vector<72x8xf32>
    %8 = arith.minimumf %7, %6 : vector<72x8xf32>
    %9 = tpu.iota {dimensions = array<i32: 1>} : vector<72x392xi32>
    %cst_4 = arith.constant 0.000000e+00 : f32
    %10 = vector.broadcast %cst_4 : f32 to vector<72x392xf32>
    %c0_i32 = arith.constant 0 : i32
    %11 = vector.broadcast %c0_i32 : i32 to vector<72x392xi32>
    %12 = arith.cmpi sge, %9, %11 : vector<72x392xi32>
    %c49_i32 = arith.constant 49 : i32
    %13 = vector.broadcast %c49_i32 : i32 to vector<72x392xi32>
    %14 = arith.cmpi slt, %9, %13 : vector<72x392xi32>
    %15 = arith.andi %12, %14 : vector<72x392xi1>
    %16 = vector.extract_strided_slice %8 {offsets = [0, 0], sizes = [72, 1], strides = [1, 1]} : vector<72x8xf32> to vector<72x1xf32>
    %17 = vector.shape_cast %16 : vector<72x1xf32> to vector<72x1xf32>
    %18 = vector.broadcast %17 : vector<72x1xf32> to vector<72x392xf32>
    %19 = arith.select %15, %18, %10 : vector<72x392xi1>, vector<72x392xf32>
    %c49_i32_5 = arith.constant 49 : i32
    %20 = vector.broadcast %c49_i32_5 : i32 to vector<72x392xi32>
    %21 = arith.cmpi sge, %9, %20 : vector<72x392xi32>
    %c98_i32 = arith.constant 98 : i32
    %22 = vector.broadcast %c98_i32 : i32 to vector<72x392xi32>
    %23 = arith.cmpi slt, %9, %22 : vector<72x392xi32>
    %24 = arith.andi %21, %23 : vector<72x392xi1>
    %25 = vector.extract_strided_slice %8 {offsets = [0, 1], sizes = [72, 1], strides = [1, 1]} : vector<72x8xf32> to vector<72x1xf32>
    %26 = vector.shape_cast %25 : vector<72x1xf32> to vector<72x1xf32>
    %27 = vector.broadcast %26 : vector<72x1xf32> to vector<72x392xf32>
    %28 = arith.select %24, %27, %19 : vector<72x392xi1>, vector<72x392xf32>
    %c98_i32_6 = arith.constant 98 : i32
    %29 = vector.broadcast %c98_i32_6 : i32 to vector<72x392xi32>
    %30 = arith.cmpi sge, %9, %29 : vector<72x392xi32>
    %c147_i32 = arith.constant 147 : i32
    %31 = vector.broadcast %c147_i32 : i32 to vector<72x392xi32>
    %32 = arith.cmpi slt, %9, %31 : vector<72x392xi32>
    %33 = arith.andi %30, %32 : vector<72x392xi1>
    %34 = vector.extract_strided_slice %8 {offsets = [0, 2], sizes = [72, 1], strides = [1, 1]} : vector<72x8xf32> to vector<72x1xf32>
    %35 = vector.shape_cast %34 : vector<72x1xf32> to vector<72x1xf32>
    %36 = vector.broadcast %35 : vector<72x1xf32> to vector<72x392xf32>
    %37 = arith.select %33, %36, %28 : vector<72x392xi1>, vector<72x392xf32>
    %c147_i32_7 = arith.constant 147 : i32
    %38 = vector.broadcast %c147_i32_7 : i32 to vector<72x392xi32>
    %39 = arith.cmpi sge, %9, %38 : vector<72x392xi32>
    %c196_i32 = arith.constant 196 : i32
    %40 = vector.broadcast %c196_i32 : i32 to vector<72x392xi32>
    %41 = arith.cmpi slt, %9, %40 : vector<72x392xi32>
    %42 = arith.andi %39, %41 : vector<72x392xi1>
    %43 = vector.extract_strided_slice %8 {offsets = [0, 3], sizes = [72, 1], strides = [1, 1]} : vector<72x8xf32> to vector<72x1xf32>
    %44 = vector.shape_cast %43 : vector<72x1xf32> to vector<72x1xf32>
    %45 = vector.broadcast %44 : vector<72x1xf32> to vector<72x392xf32>
    %46 = arith.select %42, %45, %37 : vector<72x392xi1>, vector<72x392xf32>
    %c196_i32_8 = arith.constant 196 : i32
    %47 = vector.broadcast %c196_i32_8 : i32 to vector<72x392xi32>
    %48 = arith.cmpi sge, %9, %47 : vector<72x392xi32>
    %c245_i32 = arith.constant 245 : i32
    %49 = vector.broadcast %c245_i32 : i32 to vector<72x392xi32>
    %50 = arith.cmpi slt, %9, %49 : vector<72x392xi32>
    %51 = arith.andi %48, %50 : vector<72x392xi1>
    %52 = vector.extract_strided_slice %8 {offsets = [0, 4], sizes = [72, 1], strides = [1, 1]} : vector<72x8xf32> to vector<72x1xf32>
    %53 = vector.shape_cast %52 : vector<72x1xf32> to vector<72x1xf32>
    %54 = vector.broadcast %53 : vector<72x1xf32> to vector<72x392xf32>
    %55 = arith.select %51, %54, %46 : vector<72x392xi1>, vector<72x392xf32>
    %c245_i32_9 = arith.constant 245 : i32
    %56 = vector.broadcast %c245_i32_9 : i32 to vector<72x392xi32>
    %57 = arith.cmpi sge, %9, %56 : vector<72x392xi32>
    %c294_i32 = arith.constant 294 : i32
    %58 = vector.broadcast %c294_i32 : i32 to vector<72x392xi32>
    %59 = arith.cmpi slt, %9, %58 : vector<72x392xi32>
    %60 = arith.andi %57, %59 : vector<72x392xi1>
    %61 = vector.extract_strided_slice %8 {offsets = [0, 5], sizes = [72, 1], strides = [1, 1]} : vector<72x8xf32> to vector<72x1xf32>
    %62 = vector.shape_cast %61 : vector<72x1xf32> to vector<72x1xf32>
    %63 = vector.broadcast %62 : vector<72x1xf32> to vector<72x392xf32>
    %64 = arith.select %60, %63, %55 : vector<72x392xi1>, vector<72x392xf32>
    %c294_i32_10 = arith.constant 294 : i32
    %65 = vector.broadcast %c294_i32_10 : i32 to vector<72x392xi32>
    %66 = arith.cmpi sge, %9, %65 : vector<72x392xi32>
    %c343_i32 = arith.constant 343 : i32
    %67 = vector.broadcast %c343_i32 : i32 to vector<72x392xi32>
    %68 = arith.cmpi slt, %9, %67 : vector<72x392xi32>
    %69 = arith.andi %66, %68 : vector<72x392xi1>
    %70 = vector.extract_strided_slice %8 {offsets = [0, 6], sizes = [72, 1], strides = [1, 1]} : vector<72x8xf32> to vector<72x1xf32>
    %71 = vector.shape_cast %70 : vector<72x1xf32> to vector<72x1xf32>
    %72 = vector.broadcast %71 : vector<72x1xf32> to vector<72x392xf32>
    %73 = arith.select %69, %72, %64 : vector<72x392xi1>, vector<72x392xf32>
    %c343_i32_11 = arith.constant 343 : i32
    %74 = vector.broadcast %c343_i32_11 : i32 to vector<72x392xi32>
    %75 = arith.cmpi sge, %9, %74 : vector<72x392xi32>
    %c392_i32 = arith.constant 392 : i32
    %76 = vector.broadcast %c392_i32 : i32 to vector<72x392xi32>
    %77 = arith.cmpi slt, %9, %76 : vector<72x392xi32>
    %78 = arith.andi %75, %77 : vector<72x392xi1>
    %79 = vector.extract_strided_slice %8 {offsets = [0, 7], sizes = [72, 1], strides = [1, 1]} : vector<72x8xf32> to vector<72x1xf32>
    %80 = vector.shape_cast %79 : vector<72x1xf32> to vector<72x1xf32>
    %81 = vector.broadcast %80 : vector<72x1xf32> to vector<72x392xf32>
    %82 = arith.select %78, %81, %73 : vector<72x392xi1>, vector<72x392xf32>
    %c0_12 = arith.constant 0 : index
    %c0_13 = arith.constant 0 : index
    %83 = vector.load %arg1[%c0_12, %c0_13] : memref<72x392xf32, #tpu.memory_space<vmem>>, vector<72x392xf32>
    %84 = arith.mulf %82, %83 : vector<72x392xf32>
    %c0_14 = arith.constant 0 : index
    %c0_15 = arith.constant 0 : index
    %85 = vector.load %arg2[%c0_14, %c0_15] : memref<72x392xf32, #tpu.memory_space<vmem>>, vector<72x392xf32>
    tpu.vector_store %arg2[%c0_14, %c0_15], %84 {strides = array<i32>} : memref<72x392xf32, #tpu.memory_space<vmem>>, vector<72x392xf32>,
    return
  }
}

</mosaic_0001>

<llo_original>
// kernel: tpu_custom_call.1
$region0: #{tpu_custom_call.1}
  #allocation0 [shape = 'u32[]', space=smem, size = 0x4, offset = 0x4, fixed_abs, tag = 'smem constant byte address 0x4 - core index']
  #allocation1 [shape = 'u32[72,128]{1,0:T(1,128)}', space=vmem, size = 0x9000, scoped, tag = 'internal scratch']
  %s0 = inlined_call_operand.vmem [shape: f32[72,8], index: 0, kind: input, shape index: {}]
  %s1 = inlined_call_operand.hbm [shape: f32[72,392], index: 1, kind: input, shape index: {}, may-alias: {1,2}]
  %s2 = inlined_call_operand.hbm [shape: f32[72,392], index: 2, kind: output, shape index: {}, may-alias: {1,2}]
  %s3 = sld [smem:[#allocation0]]
  $region22: #{tpu_custom_call.1} parent=0
    _
  %s5 = ssub.s32 1, %s3
  %s6 = scalar_select 0, %s5, %s3
  $region1: #{tpu_custom_call.1} parent=0
    #allocation2 [shape = 'u8[147456]{0}', space=vmem, size = 0x24000, scoped, tag = 'input window, operand 1, single buffered']
    #allocation3 [shape = 's32[1]{0}', space=sflag, size = 0x4, scoped, tag = 'scoped memory for tpu_custom_call.1']
    #allocation4 [shape = 's32[1]{0}', space=sflag, size = 0x4, scoped, tag = 'scoped memory for tpu_custom_call.1']
    #allocation5 [shape = 'u8[147456]{0}', space=vmem, size = 0x24000, scoped, tag = 'output window, operand 0, single buffered']
    %7 = vsyncpa [#allocation3], 0
    %8 = vsyncpa [#allocation4], 0
    // Predicated region
    $region2: #{tpu_custom_call.1} parent=1 // pred_check
      _
    $region3: #{tpu_custom_call.1} parent=1 // pred_check_branch
      %10 = sbr.rel (0) target = $region5
    $region4: #{tpu_custom_call.1} parent=1 // pred_region
      _
    $region5: #{tpu_custom_call.1} parent=1 // pred_fallthru
      _
    // Predicated region
    $region6: #{tpu_custom_call.1} parent=1 // pred_check
      _
    $region7: #{tpu_custom_call.1} parent=1 // pred_check_branch
      %12 = sbr.rel (0) target = $region9
    $region8: #{tpu_custom_call.1} parent=1 // pred_region
      %14 = vsyncadd [#allocation3], 0
      %s15 = sshll.u32 %s1, 4
      %s16 = int_to_ptr.hbm [resolvable:$true] %s15
      %s17 = sshll.u32 [#allocation2], 4
      %s18 = int_to_ptr.vmem [resolvable:$true] %s17
      %23 = dma.hbm_to_vmem [thread:$0]  %s16, 4608, %s18, [#allocation3], 512, 512, 32
    $region9: #{tpu_custom_call.1} parent=1 // pred_fallthru
      _
    // Predicated region
    $region10: #{tpu_custom_call.1} parent=1 // pred_check
      _
    $region11: #{tpu_custom_call.1} parent=1 // pred_check_branch
      %25 = sbr.rel (0) target = $region13
    $region12: #{tpu_custom_call.1} parent=1 // pred_region
      %27 = dma.done [#allocation3], 4608
    $region13: #{tpu_custom_call.1} parent=1 // pred_fallthru
      _
    %v28 = vld [vmem:[%s0] sm:$0xff]
    %v29 = vld [vmem:[%s0 + $0x8] sm:$0xff]
    %v30 = vld [vmem:[%s0 + $0x10] sm:$0xff]
    %v31 = vld [vmem:[%s0 + $0x18] sm:$0xff]
    %v32 = vld [vmem:[%s0 + $0x20] sm:$0xff]
    %v33 = vld [vmem:[%s0 + $0x28] sm:$0xff]
    %v34 = vld [vmem:[%s0 + $0x30] sm:$0xff]
    %v35 = vld [vmem:[%s0 + $0x38] sm:$0xff]
    %v36 = vld [vmem:[%s0 + $0x40] sm:$0xff]
    %v37 = vmul.f32 %v28, 0.16666667
    %v38 = vmul.f32 %v29, 0.16666667
    %v39 = vmul.f32 %v30, 0.16666667
    %v40 = vmul.f32 %v31, 0.16666667
    %v41 = vmul.f32 %v32, 0.16666667
    %v42 = vmul.f32 %v33, 0.16666667
    %v43 = vmul.f32 %v34, 0.16666667
    %v44 = vmul.f32 %v35, 0.16666667
    %v45 = vmul.f32 %v36, 0.16666667
    %v46 = vadd.f32 %v37, 0.5
    %v47 = vadd.f32 %v38, 0.5
    %v48 = vadd.f32 %v39, 0.5
    %v49 = vadd.f32 %v40, 0.5
    %v50 = vadd.f32 %v41, 0.5
    %v51 = vadd.f32 %v42, 0.5
    %v52 = vadd.f32 %v43, 0.5
    %v53 = vadd.f32 %v44, 0.5
    %v54 = vadd.f32 %v45, 0.5
    %v55 = vmax.f32 %v46, 0.0
    %v56 = vmax.f32 %v47, 0.0
    %v57 = vmax.f32 %v48, 0.0
    %v58 = vmax.f32 %v49, 0.0
    %v59 = vmax.f32 %v50, 0.0
    %v60 = vmax.f32 %v51, 0.0
    %v61 = vmax.f32 %v52, 0.0
    %v62 = vmax.f32 %v53, 0.0
    %v63 = vmax.f32 %v54, 0.0
    %v64 = vmin.f32 %v55, 1.0
    %v65 = vmin.f32 %v56, 1.0
    %v66 = vmin.f32 %v57, 1.0
    %v67 = vmin.f32 %v58, 1.0
    %v68 = vmin.f32 %v59, 1.0
    %v69 = vmin.f32 %v60, 1.0
    %v70 = vmin.f32 %v61, 1.0
    %v71 = vmin.f32 %v62, 1.0
    %v72 = vmin.f32 %v63, 1.0
    %v73 = vlaneseq
    %v74 = vand.u32 %v73, 127
    %v75 = vadd.s32 %v74, 128
    %v76 = vadd.s32 %v74, 256
    %v77 = vadd.s32 %v74, 384
    %vm78 = vcmp.ge.s32.totalorder %v74, 0
    %vm79 = vcmp.ge.s32.totalorder %v75, 0
    %vm80 = vcmp.ge.s32.totalorder %v76, 0
    %vm81 = vcmp.ge.s32.totalorder %v77, 0
    %vm82 = vcmp.lt.s32.totalorder %v74, 49
    %vm83 = vcmp.lt.s32.totalorder %v75, 49
    %vm84 = vcmp.lt.s32.totalorder %v76, 49
    %vm85 = vcmp.lt.s32.totalorder %v77, 49
    %vm86 = vmand %vm78, %vm82
    %vm87 = vmand %vm79, %vm83
    %vm88 = vmand %vm80, %vm84
    %vm89 = vmand %vm81, %vm85
    %91 = vset.pattern.permute.xlu0 0
    %92 = vperm.xlu0 %91, %v64
    %v93 = vpop.permute.xlu0 %92
    %96 = vset.pattern.permute.xlu0 0
    %97 = vperm.xlu0 %96, %v65
    %v98 = vpop.permute.xlu0 %97
    %101 = vset.pattern.permute.xlu0 0
    %102 = vperm.xlu0 %101, %v66
    %v103 = vpop.permute.xlu0 %102
    %106 = vset.pattern.permute.xlu0 0
    %107 = vperm.xlu0 %106, %v67
    %v108 = vpop.permute.xlu0 %107
    %111 = vset.pattern.permute.xlu0 0
    %112 = vperm.xlu0 %111, %v68
    %v113 = vpop.permute.xlu0 %112
    %116 = vset.pattern.permute.xlu0 0
    %117 = vperm.xlu0 %116, %v69
    %v118 = vpop.permute.xlu0 %117
    %121 = vset.pattern.permute.xlu0 0
    %122 = vperm.xlu0 %121, %v70
    %v123 = vpop.permute.xlu0 %122
    %126 = vset.pattern.permute.xlu0 0
    %127 = vperm.xlu0 %126, %v71
    %v128 = vpop.permute.xlu0 %127
    %131 = vset.pattern.permute.xlu0 0
    %132 = vperm.xlu0 %131, %v72
    %v133 = vpop.permute.xlu0 %132
    %v135 = vsel %vm86, %v93, 0.0
    %v136 = vsel %vm87, %v93, 0.0
    %v137 = vsel %vm88, %v93, 0.0
    %v138 = vsel %vm89, %v93, 0.0
    %v139 = vsel %vm86, %v98, 0.0
    %v140 = vsel %vm87, %v98, 0.0
    %v141 = vsel %vm88, %v98, 0.0
    %v142 = vsel %vm89, %v98, 0.0
    %v143 = vsel %vm86, %v103, 0.0
    %v144 = vsel %vm87, %v103, 0.0
    %v145 = vsel %vm88, %v103, 0.0
    %v146 = vsel %vm89, %v103, 0.0
    %v147 = vsel %vm86, %v108, 0.0
    %v148 = vsel %vm87, %v108, 0.0
    %v149 = vsel %vm88, %v108, 0.0
    %v150 = vsel %vm89, %v108, 0.0
    %v151 = vsel %vm86, %v113, 0.0
    %v152 = vsel %vm87, %v113, 0.0
    %v153 = vsel %vm88, %v113, 0.0
    %v154 = vsel %vm89, %v113, 0.0
    %v155 = vsel %vm86, %v118, 0.0
    %v156 = vsel %vm87, %v118, 0.0
    %v157 = vsel %vm88, %v118, 0.0
    %v158 = vsel %vm89, %v118, 0.0
    %v159 = vsel %vm86, %v123, 0.0
    %v160 = vsel %vm87, %v123, 0.0
    %v161 = vsel %vm88, %v123, 0.0
    %v162 = vsel %vm89, %v123, 0.0
    %v163 = vsel %vm86, %v128, 0.0
    %v164 = vsel %vm87, %v128, 0.0
    %v165 = vsel %vm88, %v128, 0.0
    %v166 = vsel %vm89, %v128, 0.0
    %v167 = vsel %vm86, %v133, 0.0
    %v168 = vsel %vm87, %v133, 0.0
    %v169 = vsel %vm88, %v133, 0.0
    %v170 = vsel %vm89, %v133, 0.0
    %vm171 = vcmp.ge.s32.totalorder %v74, 49
    %vm172 = vcmp.ge.s32.totalorder %v75, 49
    %vm173 = vcmp.ge.s32.totalorder %v76, 49
    %vm174 = vcmp.ge.s32.totalorder %v77, 49
    %vm175 = vcmp.lt.s32.totalorder %v74, 98
    %vm176 = vcmp.lt.s32.totalorder %v75, 98
    %vm177 = vcmp.lt.s32.totalorder %v76, 98
    %vm178 = vcmp.lt.s32.totalorder %v77, 98
    %vm179 = vmand %vm171, %vm175
    %vm180 = vmand %vm172, %vm176
    %vm181 = vmand %vm173, %vm177
    %vm182 = vmand %vm174, %vm178
    %183 = vset.pattern.permute.xlu0 1
    %184 = vperm.xlu0 %183, %v64
    %v185 = vpop.permute.xlu0 %184
    %187 = vset.pattern.permute.xlu0 1
    %188 = vperm.xlu0 %187, %v65
    %v189 = vpop.permute.xlu0 %188
    %191 = vset.pattern.permute.xlu0 1
    %192 = vperm.xlu0 %191, %v66
    %v193 = vpop.permute.xlu0 %192
    %195 = vset.pattern.permute.xlu0 1
    %196 = vperm.xlu0 %195, %v67
    %v197 = vpop.permute.xlu0 %196
    %199 = vset.pattern.permute.xlu0 1
    %200 = vperm.xlu0 %199, %v68
    %v201 = vpop.permute.xlu0 %200
    %203 = vset.pattern.permute.xlu0 1
    %204 = vperm.xlu0 %203, %v69
    %v205 = vpop.permute.xlu0 %204
    %207 = vset.pattern.permute.xlu0 1
    %208 = vperm.xlu0 %207, %v70
    %v209 = vpop.permute.xlu0 %208
    %211 = vset.pattern.permute.xlu0 1
    %212 = vperm.xlu0 %211, %v71
    %v213 = vpop.permute.xlu0 %212
    %215 = vset.pattern.permute.xlu0 1
    %216 = vperm.xlu0 %215, %v72
    %v217 = vpop.permute.xlu0 %216
    %v219 = vsel %vm179, %v185, %v135
    %v220 = vsel %vm180, %v185, %v136
    %v221 = vsel %vm181, %v185, %v137
    %v222 = vsel %vm182, %v185, %v138
    %v223 = vsel %vm179, %v189, %v139
    %v224 = vsel %vm180, %v189, %v140
    %v225 = vsel %vm181, %v189, %v141
    %v226 = vsel %vm182, %v189, %v142
    %v227 = vsel %vm179, %v193, %v143
    %v228 = vsel %vm180, %v193, %v144
    %v229 = vsel %vm181, %v193, %v145
    %v230 = vsel %vm182, %v193, %v146
    %v231 = vsel %vm179, %v197, %v147
    %v232 = vsel %vm180, %v197, %v148
    %v233 = vsel %vm181, %v197, %v149
    %v234 = vsel %vm182, %v197, %v150
    %v235 = vsel %vm179, %v201, %v151
    %v236 = vsel %vm180, %v201, %v152
    %v237 = vsel %vm181, %v201, %v153
    %v238 = vsel %vm182, %v201, %v154
    %v239 = vsel %vm179, %v205, %v155
    %v240 = vsel %vm180, %v205, %v156
    %v241 = vsel %vm181, %v205, %v157
    %v242 = vsel %vm182, %v205, %v158
    %v243 = vsel %vm179, %v209, %v159
    %v244 = vsel %vm180, %v209, %v160
    %v245 = vsel %vm181, %v209, %v161
    %v246 = vsel %vm182, %v209, %v162
    %v247 = vsel %vm179, %v213, %v163
    %v248 = vsel %vm180, %v213, %v164
    %v249 = vsel %vm181, %v213, %v165
    %v250 = vsel %vm182, %v213, %v166
    %v251 = vsel %vm179, %v217, %v167
    %v252 = vsel %vm180, %v217, %v168
    %v253 = vsel %vm181, %v217, %v169
    %v254 = vsel %vm182, %v217, %v170
    %vm255 = vcmp.ge.s32.totalorder %v74, 98
    %vm256 = vcmp.ge.s32.totalorder %v75, 98
    %vm257 = vcmp.ge.s32.totalorder %v76, 98
    %vm258 = vcmp.ge.s32.totalorder %v77, 98
    %vm259 = vcmp.lt.s32.totalorder %v74, 147
    %vm260 = vcmp.lt.s32.totalorder %v75, 147
    %vm261 = vcmp.lt.s32.totalorder %v76, 147
    %vm262 = vcmp.lt.s32.totalorder %v77, 147
    %vm263 = vmand %vm255, %vm259
    %vm264 = vmand %vm256, %vm260
    %vm265 = vmand %vm257, %vm261
    %vm266 = vmand %vm258, %vm262
    %267 = vset.pattern.permute.xlu0 2
    %268 = vperm.xlu0 %267, %v64
    %v269 = vpop.permute.xlu0 %268
    %271 = vset.pattern.permute.xlu0 2
    %272 = vperm.xlu0 %271, %v65
    %v273 = vpop.permute.xlu0 %272
    %275 = vset.pattern.permute.xlu0 2
    %276 = vperm.xlu0 %275, %v66
    %v277 = vpop.permute.xlu0 %276
    %279 = vset.pattern.permute.xlu0 2
    %280 = vperm.xlu0 %279, %v67
    %v281 = vpop.permute.xlu0 %280
    %283 = vset.pattern.permute.xlu0 2
    %284 = vperm.xlu0 %283, %v68
    %v285 = vpop.permute.xlu0 %284
    %287 = vset.pattern.permute.xlu0 2
    %288 = vperm.xlu0 %287, %v69
    %v289 = vpop.permute.xlu0 %288
    %291 = vset.pattern.permute.xlu0 2
    %292 = vperm.xlu0 %291, %v70
    %v293 = vpop.permute.xlu0 %292
    %295 = vset.pattern.permute.xlu0 2
    %296 = vperm.xlu0 %295, %v71
    %v297 = vpop.permute.xlu0 %296
    %299 = vset.pattern.permute.xlu0 2
    %300 = vperm.xlu0 %299, %v72
    %v301 = vpop.permute.xlu0 %300
    %v303 = vsel %vm263, %v269, %v219
    %v304 = vsel %vm264, %v269, %v220
    %v305 = vsel %vm265, %v269, %v221
    %v306 = vsel %vm266, %v269, %v222
    %v307 = vsel %vm263, %v273, %v223
    %v308 = vsel %vm264, %v273, %v224
    %v309 = vsel %vm265, %v273, %v225
    %v310 = vsel %vm266, %v273, %v226
    %v311 = vsel %vm263, %v277, %v227
    %v312 = vsel %vm264, %v277, %v228
    %v313 = vsel %vm265, %v277, %v229
    %v314 = vsel %vm266, %v277, %v230
    %v315 = vsel %vm263, %v281, %v231
    %v316 = vsel %vm264, %v281, %v232
    %v317 = vsel %vm265, %v281, %v233
    %v318 = vsel %vm266, %v281, %v234
    %v319 = vsel %vm263, %v285, %v235
    %v320 = vsel %vm264, %v285, %v236
    %v321 = vsel %vm265, %v285, %v237
    %v322 = vsel %vm266, %v285, %v238
    %v323 = vsel %vm263, %v289, %v239
    %v324 = vsel %vm264, %v289, %v240
    %v325 = vsel %vm265, %v289, %v241
    %v326 = vsel %vm266, %v289, %v242
    %v327 = vsel %vm263, %v293, %v243
    %v328 = vsel %vm264, %v293, %v244
    %v329 = vsel %vm265, %v293, %v245
    %v330 = vsel %vm266, %v293, %v246
    %v331 = vsel %vm263, %v297, %v247
    %v332 = vsel %vm264, %v297, %v248
    %v333 = vsel %vm265, %v297, %v249
    %v334 = vsel %vm266, %v297, %v250
    %v335 = vsel %vm263, %v301, %v251
    %v336 = vsel %vm264, %v301, %v252
    %v337 = vsel %vm265, %v301, %v253
    %v338 = vsel %vm266, %v301, %v254
    %vm339 = vcmp.ge.s32.totalorder %v74, 147
    %vm340 = vcmp.ge.s32.totalorder %v75, 147
    %vm341 = vcmp.ge.s32.totalorder %v76, 147
    %vm342 = vcmp.ge.s32.totalorder %v77, 147
    %vm343 = vcmp.lt.s32.totalorder %v74, 196
    %vm344 = vcmp.lt.s32.totalorder %v75, 196
    %vm345 = vcmp.lt.s32.totalorder %v76, 196
    %vm346 = vcmp.lt.s32.totalorder %v77, 196
    %vm347 = vmand %vm339, %vm343
    %vm348 = vmand %vm340, %vm344
    %vm349 = vmand %vm341, %vm345
    %vm350 = vmand %vm342, %vm346
    %351 = vset.pattern.permute.xlu0 3
    %352 = vperm.xlu0 %351, %v64
    %v353 = vpop.permute.xlu0 %352
    %355 = vset.pattern.permute.xlu0 3
    %356 = vperm.xlu0 %355, %v65
    %v357 = vpop.permute.xlu0 %356
    %359 = vset.pattern.permute.xlu0 3
    %360 = vperm.xlu0 %359, %v66
    %v361 = vpop.permute.xlu0 %360
    %363 = vset.pattern.permute.xlu0 3
    %364 = vperm.xlu0 %363, %v67
    %v365 = vpop.permute.xlu0 %364
    %367 = vset.pattern.permute.xlu0 3
    %368 = vperm.xlu0 %367, %v68
    %v369 = vpop.permute.xlu0 %368
    %371 = vset.pattern.permute.xlu0 3
    %372 = vperm.xlu0 %371, %v69
    %v373 = vpop.permute.xlu0 %372
    %375 = vset.pattern.permute.xlu0 3
    %376 = vperm.xlu0 %375, %v70
    %v377 = vpop.permute.xlu0 %376
    %379 = vset.pattern.permute.xlu0 3
    %380 = vperm.xlu0 %379, %v71
    %v381 = vpop.permute.xlu0 %380
    %383 = vset.pattern.permute.xlu0 3
    %384 = vperm.xlu0 %383, %v72
    %v385 = vpop.permute.xlu0 %384
    %v387 = vsel %vm347, %v353, %v303
    %v388 = vsel %vm348, %v353, %v304
    %v389 = vsel %vm349, %v353, %v305
    %v390 = vsel %vm350, %v353, %v306
    %v391 = vsel %vm347, %v357, %v307
    %v392 = vsel %vm348, %v357, %v308
    %v393 = vsel %vm349, %v357, %v309
    %v394 = vsel %vm350, %v357, %v310
    %v395 = vsel %vm347, %v361, %v311
    %v396 = vsel %vm348, %v361, %v312
    %v397 = vsel %vm349, %v361, %v313
    %v398 = vsel %vm350, %v361, %v314
    %v399 = vsel %vm347, %v365, %v315
    %v400 = vsel %vm348, %v365, %v316
    %v401 = vsel %vm349, %v365, %v317
    %v402 = vsel %vm350, %v365, %v318
    %v403 = vsel %vm347, %v369, %v319
    %v404 = vsel %vm348, %v369, %v320
    %v405 = vsel %vm349, %v369, %v321
    %v406 = vsel %vm350, %v369, %v322
    %v407 = vsel %vm347, %v373, %v323
    %v408 = vsel %vm348, %v373, %v324
    %v409 = vsel %vm349, %v373, %v325
    %v410 = vsel %vm350, %v373, %v326
    %v411 = vsel %vm347, %v377, %v327
    %v412 = vsel %vm348, %v377, %v328
    %v413 = vsel %vm349, %v377, %v329
    %v414 = vsel %vm350, %v377, %v330
    %v415 = vsel %vm347, %v381, %v331
    %v416 = vsel %vm348, %v381, %v332
    %v417 = vsel %vm349, %v381, %v333
    %v418 = vsel %vm350, %v381, %v334
    %v419 = vsel %vm347, %v385, %v335
    %v420 = vsel %vm348, %v385, %v336
    %v421 = vsel %vm349, %v385, %v337
    %v422 = vsel %vm350, %v385, %v338
    %vm423 = vcmp.ge.s32.totalorder %v74, 196
    %vm424 = vcmp.ge.s32.totalorder %v75, 196
    %vm425 = vcmp.ge.s32.totalorder %v76, 196
    %vm426 = vcmp.ge.s32.totalorder %v77, 196
    %vm427 = vcmp.lt.s32.totalorder %v74, 245
    %vm428 = vcmp.lt.s32.totalorder %v75, 245
    %vm429 = vcmp.lt.s32.totalorder %v76, 245
    %vm430 = vcmp.lt.s32.totalorder %v77, 245
    %vm431 = vmand %vm423, %vm427
    %vm432 = vmand %vm424, %vm428
    %vm433 = vmand %vm425, %vm429
    %vm434 = vmand %vm426, %vm430
    %435 = vset.pattern.permute.xlu0 4
    %436 = vperm.xlu0 %435, %v64
    %v437 = vpop.permute.xlu0 %436
    %439 = vset.pattern.permute.xlu0 4
    %440 = vperm.xlu0 %439, %v65
    %v441 = vpop.permute.xlu0 %440
    %443 = vset.pattern.permute.xlu0 4
    %444 = vperm.xlu0 %443, %v66
    %v445 = vpop.permute.xlu0 %444
    %447 = vset.pattern.permute.xlu0 4
    %448 = vperm.xlu0 %447, %v67
    %v449 = vpop.permute.xlu0 %448
    %451 = vset.pattern.permute.xlu0 4
    %452 = vperm.xlu0 %451, %v68
    %v453 = vpop.permute.xlu0 %452
    %455 = vset.pattern.permute.xlu0 4
    %456 = vperm.xlu0 %455, %v69
    %v457 = vpop.permute.xlu0 %456
    %459 = vset.pattern.permute.xlu0 4
    %460 = vperm.xlu0 %459, %v70
    %v461 = vpop.permute.xlu0 %460
    %463 = vset.pattern.permute.xlu0 4
    %464 = vperm.xlu0 %463, %v71
    %v465 = vpop.permute.xlu0 %464
    %467 = vset.pattern.permute.xlu0 4
    %468 = vperm.xlu0 %467, %v72
    %v469 = vpop.permute.xlu0 %468
    %v471 = vsel %vm431, %v437, %v387
    %v472 = vsel %vm432, %v437, %v388
    %v473 = vsel %vm433, %v437, %v389
    %v474 = vsel %vm434, %v437, %v390
    %v475 = vsel %vm431, %v441, %v391
    %v476 = vsel %vm432, %v441, %v392
    %v477 = vsel %vm433, %v441, %v393
    %v478 = vsel %vm434, %v441, %v394
    %v479 = vsel %vm431, %v445, %v395
    %v480 = vsel %vm432, %v445, %v396
    %v481 = vsel %vm433, %v445, %v397
    %v482 = vsel %vm434, %v445, %v398
    %v483 = vsel %vm431, %v449, %v399
    %v484 = vsel %vm432, %v449, %v400
    %v485 = vsel %vm433, %v449, %v401
    %v486 = vsel %vm434, %v449, %v402
    %v487 = vsel %vm431, %v453, %v403
    %v488 = vsel %vm432, %v453, %v404
    %v489 = vsel %vm433, %v453, %v405
    %v490 = vsel %vm434, %v453, %v406
    %v491 = vsel %vm431, %v457, %v407
    %v492 = vsel %vm432, %v457, %v408
    %v493 = vsel %vm433, %v457, %v409
    %v494 = vsel %vm434, %v457, %v410
    %v495 = vsel %vm431, %v461, %v411
    %v496 = vsel %vm432, %v461, %v412
    %v497 = vsel %vm433, %v461, %v413
    %v498 = vsel %vm434, %v461, %v414
    %v499 = vsel %vm431, %v465, %v415
    %v500 = vsel %vm432, %v465, %v416
    %v501 = vsel %vm433, %v465, %v417
    %v502 = vsel %vm434, %v465, %v418
    %v503 = vsel %vm431, %v469, %v419
    %v504 = vsel %vm432, %v469, %v420
    %v505 = vsel %vm433, %v469, %v421
    %v506 = vsel %vm434, %v469, %v422
    %vm507 = vcmp.ge.s32.totalorder %v74, 245
    %vm508 = vcmp.ge.s32.totalorder %v75, 245
    %vm509 = vcmp.ge.s32.totalorder %v76, 245
    %vm510 = vcmp.ge.s32.totalorder %v77, 245
    %vm511 = vcmp.lt.s32.totalorder %v74, 294
    %vm512 = vcmp.lt.s32.totalorder %v75, 294
    %vm513 = vcmp.lt.s32.totalorder %v76, 294
    %vm514 = vcmp.lt.s32.totalorder %v77, 294
    %vm515 = vmand %vm507, %vm511
    %vm516 = vmand %vm508, %vm512
    %vm517 = vmand %vm509, %vm513
    %vm518 = vmand %vm510, %vm514
    %519 = vset.pattern.permute.xlu0 5
    %520 = vperm.xlu0 %519, %v64
    %v521 = vpop.permute.xlu0 %520
    %523 = vset.pattern.permute.xlu0 5
    %524 = vperm.xlu0 %523, %v65
    %v525 = vpop.permute.xlu0 %524
    %527 = vset.pattern.permute.xlu0 5
    %528 = vperm.xlu0 %527, %v66
    %v529 = vpop.permute.xlu0 %528
    %531 = vset.pattern.permute.xlu0 5
    %532 = vperm.xlu0 %531, %v67
    %v533 = vpop.permute.xlu0 %532
    %535 = vset.pattern.permute.xlu0 5
    %536 = vperm.xlu0 %535, %v68
    %v537 = vpop.permute.xlu0 %536
    %539 = vset.pattern.permute.xlu0 5
    %540 = vperm.xlu0 %539, %v69
    %v541 = vpop.permute.xlu0 %540
    %543 = vset.pattern.permute.xlu0 5
    %544 = vperm.xlu0 %543, %v70
    %v545 = vpop.permute.xlu0 %544
    %547 = vset.pattern.permute.xlu0 5
    %548 = vperm.xlu0 %547, %v71
    %v549 = vpop.permute.xlu0 %548
    %551 = vset.pattern.permute.xlu0 5
    %552 = vperm.xlu0 %551, %v72
    %v553 = vpop.permute.xlu0 %552
    %v555 = vsel %vm515, %v521, %v471
    %v556 = vsel %vm516, %v521, %v472
    %v557 = vsel %vm517, %v521, %v473
    %v558 = vsel %vm518, %v521, %v474
    %v559 = vsel %vm515, %v525, %v475
    %v560 = vsel %vm516, %v525, %v476
    %v561 = vsel %vm517, %v525, %v477
    %v562 = vsel %vm518, %v525, %v478
    %v563 = vsel %vm515, %v529, %v479
    %v564 = vsel %vm516, %v529, %v480
    %v565 = vsel %vm517, %v529, %v481
    %v566 = vsel %vm518, %v529, %v482
    %v567 = vsel %vm515, %v533, %v483
    %v568 = vsel %vm516, %v533, %v484
    %v569 = vsel %vm517, %v533, %v485
    %v570 = vsel %vm518, %v533, %v486
    %v571 = vsel %vm515, %v537, %v487
    %v572 = vsel %vm516, %v537, %v488
    %v573 = vsel %vm517, %v537, %v489
    %v574 = vsel %vm518, %v537, %v490
    %v575 = vsel %vm515, %v541, %v491
    %v576 = vsel %vm516, %v541, %v492
    %v577 = vsel %vm517, %v541, %v493
    %v578 = vsel %vm518, %v541, %v494
    %v579 = vsel %vm515, %v545, %v495
    %v580 = vsel %vm516, %v545, %v496
    %v581 = vsel %vm517, %v545, %v497
    %v582 = vsel %vm518, %v545, %v498
    %v583 = vsel %vm515, %v549, %v499
    %v584 = vsel %vm516, %v549, %v500
    %v585 = vsel %vm517, %v549, %v501
    %v586 = vsel %vm518, %v549, %v502
    %v587 = vsel %vm515, %v553, %v503
    %v588 = vsel %vm516, %v553, %v504
    %v589 = vsel %vm517, %v553, %v505
    %v590 = vsel %vm518, %v553, %v506
    %vm591 = vcmp.ge.s32.totalorder %v74, 294
    %vm592 = vcmp.ge.s32.totalorder %v75, 294
    %vm593 = vcmp.ge.s32.totalorder %v76, 294
    %vm594 = vcmp.ge.s32.totalorder %v77, 294
    %vm595 = vcmp.lt.s32.totalorder %v74, 343
    %vm596 = vcmp.lt.s32.totalorder %v75, 343
    %vm597 = vcmp.lt.s32.totalorder %v76, 343
    %vm598 = vcmp.lt.s32.totalorder %v77, 343
    %vm599 = vmand %vm591, %vm595
    %vm600 = vmand %vm592, %vm596
    %vm601 = vmand %vm593, %vm597
    %vm602 = vmand %vm594, %vm598
    %603 = vset.pattern.permute.xlu0 6
    %604 = vperm.xlu0 %603, %v64
    %v605 = vpop.permute.xlu0 %604
    %607 = vset.pattern.permute.xlu0 6
    %608 = vperm.xlu0 %607, %v65
    %v609 = vpop.permute.xlu0 %608
    %611 = vset.pattern.permute.xlu0 6
    %612 = vperm.xlu0 %611, %v66
    %v613 = vpop.permute.xlu0 %612
    %615 = vset.pattern.permute.xlu0 6
    %616 = vperm.xlu0 %615, %v67
    %v617 = vpop.permute.xlu0 %616
    %619 = vset.pattern.permute.xlu0 6
    %620 = vperm.xlu0 %619, %v68
    %v621 = vpop.permute.xlu0 %620
    %623 = vset.pattern.permute.xlu0 6
    %624 = vperm.xlu0 %623, %v69
    %v625 = vpop.permute.xlu0 %624
    %627 = vset.pattern.permute.xlu0 6
    %628 = vperm.xlu0 %627, %v70
    %v629 = vpop.permute.xlu0 %628
    %631 = vset.pattern.permute.xlu0 6
    %632 = vperm.xlu0 %631, %v71
    %v633 = vpop.permute.xlu0 %632
    %635 = vset.pattern.permute.xlu0 6
    %636 = vperm.xlu0 %635, %v72
    %v637 = vpop.permute.xlu0 %636
    %v639 = vsel %vm599, %v605, %v555
    %v640 = vsel %vm600, %v605, %v556
    %v641 = vsel %vm601, %v605, %v557
    %v642 = vsel %vm602, %v605, %v558
    %v643 = vsel %vm599, %v609, %v559
    %v644 = vsel %vm600, %v609, %v560
    %v645 = vsel %vm601, %v609, %v561
    %v646 = vsel %vm602, %v609, %v562
    %v647 = vsel %vm599, %v613, %v563
    %v648 = vsel %vm600, %v613, %v564
    %v649 = vsel %vm601, %v613, %v565
    %v650 = vsel %vm602, %v613, %v566
    %v651 = vsel %vm599, %v617, %v567
    %v652 = vsel %vm600, %v617, %v568
    %v653 = vsel %vm601, %v617, %v569
    %v654 = vsel %vm602, %v617, %v570
    %v655 = vsel %vm599, %v621, %v571
    %v656 = vsel %vm600, %v621, %v572
    %v657 = vsel %vm601, %v621, %v573
    %v658 = vsel %vm602, %v621, %v574
    %v659 = vsel %vm599, %v625, %v575
    %v660 = vsel %vm600, %v625, %v576
    %v661 = vsel %vm601, %v625, %v577
    %v662 = vsel %vm602, %v625, %v578
    %v663 = vsel %vm599, %v629, %v579
    %v664 = vsel %vm600, %v629, %v580
    %v665 = vsel %vm601, %v629, %v581
    %v666 = vsel %vm602, %v629, %v582
    %v667 = vsel %vm599, %v633, %v583
    %v668 = vsel %vm600, %v633, %v584
    %v669 = vsel %vm601, %v633, %v585
    %v670 = vsel %vm602, %v633, %v586
    %v671 = vsel %vm599, %v637, %v587
    %v672 = vsel %vm600, %v637, %v588
    %v673 = vsel %vm601, %v637, %v589
    %v674 = vsel %vm602, %v637, %v590
    %vm675 = vcmp.ge.s32.totalorder %v74, 343
    %vm676 = vcmp.ge.s32.totalorder %v75, 343
    %vm677 = vcmp.ge.s32.totalorder %v76, 343
    %vm678 = vcmp.ge.s32.totalorder %v77, 343
    %vm679 = vcmp.lt.s32.totalorder %v74, 392
    %vm680 = vcmp.lt.s32.totalorder %v75, 392
    %vm681 = vcmp.lt.s32.totalorder %v76, 392
    %vm682 = vcmp.lt.s32.totalorder %v77, 392
    %vm683 = vmand %vm675, %vm679
    %vm684 = vmand %vm676, %vm680
    %vm685 = vmand %vm677, %vm681
    %vm686 = vmand %vm678, %vm682
    %687 = vset.pattern.permute.xlu0 7
    %688 = vperm.xlu0 %687, %v64
    %v689 = vpop.permute.xlu0 %688
    %691 = vset.pattern.permute.xlu0 7
    %692 = vperm.xlu0 %691, %v65
    %v693 = vpop.permute.xlu0 %692
    %695 = vset.pattern.permute.xlu0 7
    %696 = vperm.xlu0 %695, %v66
    %v697 = vpop.permute.xlu0 %696
    %699 = vset.pattern.permute.xlu0 7
    %700 = vperm.xlu0 %699, %v67
    %v701 = vpop.permute.xlu0 %700
    %703 = vset.pattern.permute.xlu0 7
    %704 = vperm.xlu0 %703, %v68
    %v705 = vpop.permute.xlu0 %704
    %707 = vset.pattern.permute.xlu0 7
    %708 = vperm.xlu0 %707, %v69
    %v709 = vpop.permute.xlu0 %708
    %711 = vset.pattern.permute.xlu0 7
    %712 = vperm.xlu0 %711, %v70
    %v713 = vpop.permute.xlu0 %712
    %715 = vset.pattern.permute.xlu0 7
    %716 = vperm.xlu0 %715, %v71
    %v717 = vpop.permute.xlu0 %716
    %719 = vset.pattern.permute.xlu0 7
    %720 = vperm.xlu0 %719, %v72
    %v721 = vpop.permute.xlu0 %720
    %v723 = vsel %vm683, %v689, %v639
    %v724 = vsel %vm684, %v689, %v640
    %v725 = vsel %vm685, %v689, %v641
    %v726 = vsel %vm686, %v689, %v642
    %v727 = vsel %vm683, %v693, %v643
    %v728 = vsel %vm684, %v693, %v644
    %v729 = vsel %vm685, %v693, %v645
    %v730 = vsel %vm686, %v693, %v646
    %v731 = vsel %vm683, %v697, %v647
    %v732 = vsel %vm684, %v697, %v648
    %v733 = vsel %vm685, %v697, %v649
    %v734 = vsel %vm686, %v697, %v650
    %v735 = vsel %vm683, %v701, %v651
    %v736 = vsel %vm684, %v701, %v652
    %v737 = vsel %vm685, %v701, %v653
    %v738 = vsel %vm686, %v701, %v654
    %v739 = vsel %vm683, %v705, %v655
    %v740 = vsel %vm684, %v705, %v656
    %v741 = vsel %vm685, %v705, %v657
    %v742 = vsel %vm686, %v705, %v658
    %v743 = vsel %vm683, %v709, %v659
    %v744 = vsel %vm684, %v709, %v660
    %v745 = vsel %vm685, %v709, %v661
    %v746 = vsel %vm686, %v709, %v662
    %v747 = vsel %vm683, %v713, %v663
    %v748 = vsel %vm684, %v713, %v664
    %v749 = vsel %vm685, %v713, %v665
    %v750 = vsel %vm686, %v713, %v666
    %v751 = vsel %vm683, %v717, %v667
    %v752 = vsel %vm684, %v717, %v668
    %v753 = vsel %vm685, %v717, %v669
    %v754 = vsel %vm686, %v717, %v670
    %v755 = vsel %vm683, %v721, %v671
    %v756 = vsel %vm684, %v721, %v672
    %v757 = vsel %vm685, %v721, %v673
    %v758 = vsel %vm686, %v721, %v674
    %v759 = vld [vmem:[#allocation2] sm:$0xff]
    %v760 = vld [vmem:[#allocation2 + $0x8] sm:$0xff]
    %v761 = vld [vmem:[#allocation2 + $0x10] sm:$0xff]
    %v762 = vld [vmem:[#allocation2 + $0x18] sm:$0xff]
    %v763 = vld [vmem:[#allocation2 + $0x20] sm:$0xff]
    %v764 = vld [vmem:[#allocation2 + $0x28] sm:$0xff]
    %v765 = vld [vmem:[#allocation2 + $0x30] sm:$0xff]
    %v766 = vld [vmem:[#allocation2 + $0x38] sm:$0xff]
    %v767 = vld [vmem:[#allocation2 + $0x40] sm:$0xff]
    %v768 = vld [vmem:[#allocation2 + $0x48] sm:$0xff]
    %v769 = vld [vmem:[#allocation2 + $0x50] sm:$0xff]
    %v770 = vld [vmem:[#allocation2 + $0x58] sm:$0xff]
    %v771 = vld [vmem:[#allocation2 + $0x60] sm:$0xff]
    %v772 = vld [vmem:[#allocation2 + $0x68] sm:$0xff]
    %v773 = vld [vmem:[#allocation2 + $0x70] sm:$0xff]
    %v774 = vld [vmem:[#allocation2 + $0x78] sm:$0xff]
    %v775 = vld [vmem:[#allocation2 + $0x80] sm:$0xff]
    %v776 = vld [vmem:[#allocation2 + $0x88] sm:$0xff]
    %v777 = vld [vmem:[#allocation2 + $0x90] sm:$0xff]
    %v778 = vld [vmem:[#allocation2 + $0x98] sm:$0xff]
    %v779 = vld [vmem:[#allocation2 + $0xa0] sm:$0xff]
    %v780 = vld [vmem:[#allocation2 + $0xa8] sm:$0xff]
    %v781 = vld [vmem:[#allocation2 + $0xb0] sm:$0xff]
    %v782 = vld [vmem:[#allocation2 + $0xb8] sm:$0xff]
    %v783 = vld [vmem:[#allocation2 + $0xc0] sm:$0xff]
    %v784 = vld [vmem:[#allocation2 + $0xc8] sm:$0xff]
    %v785 = vld [vmem:[#allocation2 + $0xd0] sm:$0xff]
    %v786 = vld [vmem:[#allocation2 + $0xd8] sm:$0xff]
    %v787 = vld [vmem:[#allocation2 + $0xe0] sm:$0xff]
    %v788 = vld [vmem:[#allocation2 + $0xe8] sm:$0xff]
    %v789 = vld [vmem:[#allocation2 + $0xf0] sm:$0xff]
    %v790 = vld [vmem:[#allocation2 + $0xf8] sm:$0xff]
    %v791 = vld [vmem:[#allocation2 + $0x100] sm:$0xff]
    %v792 = vld [vmem:[#allocation2 + $0x108] sm:$0xff]
    %v793 = vld [vmem:[#allocation2 + $0x110] sm:$0xff]
    %v794 = vld [vmem:[#allocation2 + $0x118] sm:$0xff]
    %v795 = vmul.f32 %v723, %v759
    %v796 = vmul.f32 %v724, %v760
    %v797 = vmul.f32 %v725, %v761
    %v798 = vmul.f32 %v726, %v762
    %v799 = vmul.f32 %v727, %v763
    %v800 = vmul.f32 %v728, %v764
    %v801 = vmul.f32 %v729, %v765
    %v802 = vmul.f32 %v730, %v766
    %v803 = vmul.f32 %v731, %v767
    %v804 = vmul.f32 %v732, %v768
    %v805 = vmul.f32 %v733, %v769
    %v806 = vmul.f32 %v734, %v770
    %v807 = vmul.f32 %v735, %v771
    %v808 = vmul.f32 %v736, %v772
    %v809 = vmul.f32 %v737, %v773
    %v810 = vmul.f32 %v738, %v774
    %v811 = vmul.f32 %v739, %v775
    %v812 = vmul.f32 %v740, %v776
    %v813 = vmul.f32 %v741, %v777
    %v814 = vmul.f32 %v742, %v778
    %v815 = vmul.f32 %v743, %v779
    %v816 = vmul.f32 %v744, %v780
    %v817 = vmul.f32 %v745, %v781
    %v818 = vmul.f32 %v746, %v782
    %v819 = vmul.f32 %v747, %v783
    %v820 = vmul.f32 %v748, %v784
    %v821 = vmul.f32 %v749, %v785
    %v822 = vmul.f32 %v750, %v786
    %v823 = vmul.f32 %v751, %v787
    %v824 = vmul.f32 %v752, %v788
    %v825 = vmul.f32 %v753, %v789
    %v826 = vmul.f32 %v754, %v790
    %v827 = vmul.f32 %v755, %v791
    %v828 = vmul.f32 %v756, %v792
    %v829 = vmul.f32 %v757, %v793
    %v830 = vmul.f32 %v758, %v794
    %831 = vst [vmem:[#allocation5] sm:$0xff] %v795
    %832 = vst [vmem:[#allocation5 + $0x8] sm:$0xff] %v796
    %833 = vst [vmem:[#allocation5 + $0x10] sm:$0xff] %v797
    %vm834 = vcmask 64512
    %835 = vst.msk [vmem:[#allocation5 + $0x18] sm:$0xff] %vm834, %v798
    %836 = vst [vmem:[#allocation5 + $0x20] sm:$0xff] %v799
    %837 = vst [vmem:[#allocation5 + $0x28] sm:$0xff] %v800
    %838 = vst [vmem:[#allocation5 + $0x30] sm:$0xff] %v801
    %839 = vst.msk [vmem:[#allocation5 + $0x38] sm:$0xff] %vm834, %v802
    %840 = vst [vmem:[#allocation5 + $0x40] sm:$0xff] %v803
    %841 = vst [vmem:[#allocation5 + $0x48] sm:$0xff] %v804
    %842 = vst [vmem:[#allocation5 + $0x50] sm:$0xff] %v805
    %843 = vst.msk [vmem:[#allocation5 + $0x58] sm:$0xff] %vm834, %v806
    %844 = vst [vmem:[#allocation5 + $0x60] sm:$0xff] %v807
    %845 = vst [vmem:[#allocation5 + $0x68] sm:$0xff] %v808
    %846 = vst [vmem:[#allocation5 + $0x70] sm:$0xff] %v809
    %847 = vst.msk [vmem:[#allocation5 + $0x78] sm:$0xff] %vm834, %v810
    %848 = vst [vmem:[#allocation5 + $0x80] sm:$0xff] %v811
    %849 = vst [vmem:[#allocation5 + $0x88] sm:$0xff] %v812
    %850 = vst [vmem:[#allocation5 + $0x90] sm:$0xff] %v813
    %851 = vst.msk [vmem:[#allocation5 + $0x98] sm:$0xff] %vm834, %v814
    %852 = vst [vmem:[#allocation5 + $0xa0] sm:$0xff] %v815
    %853 = vst [vmem:[#allocation5 + $0xa8] sm:$0xff] %v816
    %854 = vst [vmem:[#allocation5 + $0xb0] sm:$0xff] %v817
    %855 = vst.msk [vmem:[#allocation5 + $0xb8] sm:$0xff] %vm834, %v818
    %856 = vst [vmem:[#allocation5 + $0xc0] sm:$0xff] %v819
    %857 = vst [vmem:[#allocation5 + $0xc8] sm:$0xff] %v820
    %858 = vst [vmem:[#allocation5 + $0xd0] sm:$0xff] %v821
    %859 = vst.msk [vmem:[#allocation5 + $0xd8] sm:$0xff] %vm834, %v822
    %860 = vst [vmem:[#allocation5 + $0xe0] sm:$0xff] %v823
    %861 = vst [vmem:[#allocation5 + $0xe8] sm:$0xff] %v824
    %862 = vst [vmem:[#allocation5 + $0xf0] sm:$0xff] %v825
    %863 = vst.msk [vmem:[#allocation5 + $0xf8] sm:$0xff] %vm834, %v826
    %864 = vst [vmem:[#allocation5 + $0x100] sm:$0xff] %v827
    %865 = vst [vmem:[#allocation5 + $0x108] sm:$0xff] %v828
    %866 = vst [vmem:[#allocation5 + $0x110] sm:$0xff] %v829
    %867 = vst.msk [vmem:[#allocation5 + $0x118] sm:$0xff] %vm834, %v830
    // Predicated region
    $region14: #{tpu_custom_call.1} parent=1 // pred_check
      _
    $region15: #{tpu_custom_call.1} parent=1 // pred_check_branch
      %869 = sbr.rel (0) target = $region17
    $region16: #{tpu_custom_call.1} parent=1 // pred_region
      %871 = vsyncadd [#allocation4], 0
      %s872 = sshll.u32 [#allocation5], 4
      %s873 = int_to_ptr.vmem [resolvable:$true] %s872
      %s874 = sshll.u32 %s2, 4
      %s875 = int_to_ptr.hbm [resolvable:$true] %s874
      %880 = dma.vmem_to_hbm [thread:$0]  %s873, 4608, %s875, [#allocation4], 512, 512, 32
    $region17: #{tpu_custom_call.1} parent=1 // pred_fallthru
      _
    // Predicated region
    $region18: #{tpu_custom_call.1} parent=1 // pred_check
      _
    $region19: #{tpu_custom_call.1} parent=1 // pred_check_branch
      %882 = sbr.rel (0) target = $region21
    $region20: #{tpu_custom_call.1} parent=1 // pred_region
      %884 = dma.done [#allocation4], 4608
    $region21: #{tpu_custom_call.1} parent=1 // pred_fallthru
      _
    %885 = vsyncpa [#allocation3], 1
    %886 = vsyncpa [#allocation4], 1

</llo_original>
